<compile_context>
chip_gen: v7x
topology: tpu7x:2x2x1
jax: 0.10.0
libtpu: 0.0.40
codegen_flags: <defaults>
</compile_context>

<pallas_src>
import functools

import jax
import jax.numpy as jnp
from jax.experimental import pallas as pl
from jax.experimental.pallas import tpu as pltpu


# ---------------------------------------------------------------------------
# small helpers (plain JAX glue, run once at setup / outside the hot kernels)
# ---------------------------------------------------------------------------
def _round_up(x, m):
    return (x + m - 1) // m * m


def _pad2(a, rows, cols):
    r, c = a.shape
    return jnp.pad(a, ((0, rows - r), (0, cols - c)))


def _pad_gates(w, h, hp):
    """(R, 4*h) -> (R, 4*hp): each gate block placed at a hp-aligned offset."""
    r = w.shape[0]
    out = jnp.zeros((r, 4 * hp), w.dtype)
    for g in range(4):
        out = out.at[:, g * hp:g * hp + h].set(w[:, g * h:(g + 1) * h])
    return out


def _pad_rnn_fc(w, n_feat, n_feat_pad, h, hp, dout_p):
    """(n_feat*h, Dout) -> (n_feat_pad*hp, dout_p) matching padded hidden layout."""
    dout = w.shape[1]
    out = jnp.zeros((n_feat_pad * hp, dout_p), w.dtype)
    for n in range(n_feat):
        out = out.at[n * hp:n * hp + h, :dout].set(w[n * h:(n + 1) * h, :])
    return out


def im2col_3x3(x_nchw):
    # 3x3, stride 1, padding 1  ->  (B, H*W, Cin*9)
    B, C, H, W = x_nchw.shape
    xp = jnp.pad(x_nchw, ((0, 0), (0, 0), (1, 1), (1, 1)))
    taps = []
    for dh in range(3):
        for dw in range(3):
            taps.append(xp[:, :, dh:dh + H, dw:dw + W])
    p = jnp.stack(taps, axis=2)                 # (B, C, 9, H, W)
    p = p.transpose(0, 3, 4, 1, 2)              # (B, H, W, C, 9)
    return p.reshape(B, H * W, C * 9)


def _pick_tm(hw, kp, bytes_per_elem, budget_bytes=4 << 20):
    """HW-tile rows sized from a per-buffer VMEM budget (multiple of 16)."""
    tm = budget_bytes // max(1, kp * bytes_per_elem)
    tm = max(16, (min(tm, 1024) // 16) * 16)
    return min(tm, _round_up(hw, 16))


# ---------------------------------------------------------------------------
# CNN encoder hot path: conv-as-matmul over bf16 im2col tiles + ReLU + GAP.
# grid = (image, hw_tile); per-image mean accumulated directly into the
# resident (Bp, Cp) output block (masked row-sum, no pool matrix).
# ---------------------------------------------------------------------------
def _conv_gap_kernel(p_ref, wc_ref, bc_ref, o_ref, *, hw, tm):
    b = pl.program_id(0)
    m = pl.program_id(1)

    @pl.when((b == 0) & (m == 0))
    def _():
        o_ref[...] = jnp.zeros_like(o_ref)

    y = jnp.dot(p_ref[0], wc_ref[...], preferred_element_type=jnp.float32)  # (tm, Cp)
    y = jnp.maximum(y + bc_ref[...], 0.0)                                   # bias + ReLU
    # mask zero-padded patch rows (ReLU(b_conv) != 0 there)
    row = m * tm + jax.lax.broadcasted_iota(jnp.int32, (tm, 1), 0)
    y = jnp.where(row < hw, y, 0.0)
    pooled = jnp.sum(y, axis=0, keepdims=True) * (1.0 / hw)                 # (1, Cp)
    onehot = jax.lax.broadcasted_iota(jnp.int32, (o_ref.shape[0], 1), 0) == b
    o_ref[...] += jnp.where(onehot, pooled, 0.0)


def conv_relu_gap(patches, w_conv, b_conv, *, hw, tm, rows_out):
    # patches: (B, HWp, Kp) bf16 ; w_conv: (Kp, Cp) bf16 ; b_conv: (1, Cp) f32
    B, HWp, Kp = patches.shape
    Cp = w_conv.shape[1]
    kernel = functools.partial(_conv_gap_kernel, hw=hw, tm=tm)
    return pl.pallas_call(
        kernel,
        out_shape=jax.ShapeDtypeStruct((rows_out, Cp), jnp.float32),
        grid_spec=pltpu.PrefetchScalarGridSpec(
            num_scalar_prefetch=0,
            grid=(B, HWp // tm),
            in_specs=[
                pl.BlockSpec((1, tm, Kp), lambda b, m: (b, m, 0)),
                pl.BlockSpec((Kp, Cp), lambda b, m: (0, 0)),
                pl.BlockSpec((1, Cp), lambda b, m: (0, 0)),
            ],
            out_specs=pl.BlockSpec((rows_out, Cp), lambda b, m: (0, 0)),
        ),
        compiler_params=pltpu.CompilerParams(
            dimension_semantics=("arbitrary", "arbitrary"),
            vmem_limit_bytes=32 * 1024 * 1024,
        ),
    )(patches, w_conv, b_conv)


# ---------------------------------------------------------------------------
# Fused LSTM kernel: per-T-chunk x @ W_ih on the MXU (parked in VMEM scratch)
# followed by the serial recurrence (h @ W_hh + gates).  h/c live in VMEM
# scratch and carry across grid steps; W_hh stays in VMEM (not pinned in
# vregs).  Gate order i, f, g, o as in torch.nn.LSTM; gate blocks Hp-aligned.
# ---------------------------------------------------------------------------
def _lstm_fused_kernel(x_ref, wih_ref, b_ref, whh_ref, o_ref, gx_ref, h_ref, c_ref):
    chunk = pl.program_id(0)
    n = h_ref.shape[0]           # padded "batch" (num_features) rows
    hp = h_ref.shape[1]          # padded hidden
    tc = x_ref.shape[0] // n     # timesteps in this chunk

    @pl.when(chunk == 0)
    def _():
        h_ref[...] = jnp.zeros_like(h_ref)
        c_ref[...] = jnp.zeros_like(c_ref)

    # Chunk-level input transform: (Tc*Np, Lp) @ (Lp, 4Hp)  (+ bias)
    gx_ref[...] = (
        jnp.dot(x_ref[...].astype(jnp.bfloat16), wih_ref[...],
                preferred_element_type=jnp.float32)
        + b_ref[...])

    def step(t, carry):
        base = pl.multiple_of(t * n, n)
        gates = gx_ref[pl.ds(base, n), :] + jnp.dot(
            h_ref[...].astype(jnp.bfloat16), whh_ref[...],
            preferred_element_type=jnp.float32)
        i = jax.nn.sigmoid(gates[:, 0 * hp:1 * hp])
        f = jax.nn.sigmoid(gates[:, 1 * hp:2 * hp])
        g = jnp.tanh(gates[:, 2 * hp:3 * hp])
        o = jax.nn.sigmoid(gates[:, 3 * hp:4 * hp])
        c_new = f * c_ref[...] + i * g
        h_new = o * jnp.tanh(c_new)
        c_ref[...] = c_new
        h_ref[...] = h_new
        o_ref[pl.ds(base, n), :] = h_new
        return carry

    jax.lax.fori_loop(0, tc, step, 0, unroll=min(4, tc))


def lstm_fused(x2d, w_ih, b_lstm, w_hh, *, n_pad, t_chunk):
    # x2d: (T_pad*Np, Lp) f32 ; weights bf16 ; bias (1, 4Hp) f32
    rows, Lp = x2d.shape
    Hp = w_hh.shape[0]
    rows_chunk = t_chunk * n_pad
    n_chunks = rows // rows_chunk
    return pl.pallas_call(
        _lstm_fused_kernel,
        out_shape=jax.ShapeDtypeStruct((rows, Hp), jnp.float32),
        grid_spec=pltpu.PrefetchScalarGridSpec(
            num_scalar_prefetch=0,
            grid=(n_chunks,),
            in_specs=[
                pl.BlockSpec((rows_chunk, Lp), lambda c: (c, 0)),
                pl.BlockSpec((Lp, 4 * Hp), lambda c: (0, 0)),
                pl.BlockSpec((1, 4 * Hp), lambda c: (0, 0)),
                pl.BlockSpec((Hp, 4 * Hp), lambda c: (0, 0)),
            ],
            out_specs=pl.BlockSpec((rows_chunk, Hp), lambda c: (c, 0)),
            scratch_shapes=[
                pltpu.VMEM((rows_chunk, 4 * Hp), jnp.float32),  # gx chunk
                pltpu.VMEM((n_pad, Hp), jnp.float32),           # h carry
                pltpu.VMEM((n_pad, Hp), jnp.float32),           # c carry
            ],
        ),
        compiler_params=pltpu.CompilerParams(
            dimension_semantics=("arbitrary",),
            vmem_limit_bytes=32 * 1024 * 1024,
        ),
    )(x2d, w_ih, b_lstm, w_hh)


# ---------------------------------------------------------------------------
# Fused tail: cnn_fc + rnn_fc + concat + final linear in one kernel.
#   out = (feat @ Wcnn + bcnn) @ Wf_a + (hid @ Wrnn + brnn) @ Wf_b + b_final
# ---------------------------------------------------------------------------
def _tail_kernel(feat_ref, hid_ref, wcf_ref, bcf_ref, wrf_ref, brf_ref,
                 wfa_ref, wfb_ref, bf_ref, o_ref):
    enc = (jnp.dot(feat_ref[...].astype(jnp.bfloat16), wcf_ref[...],
                   preferred_element_type=jnp.float32) + bcf_ref[...])
    rnn = (jnp.dot(hid_ref[...].astype(jnp.bfloat16), wrf_ref[...],
                   preferred_element_type=jnp.float32) + brf_ref[...])
    o_ref[...] = (
        jnp.dot(enc.astype(jnp.bfloat16), wfa_ref[...],
                preferred_element_type=jnp.float32)
        + jnp.dot(rnn.astype(jnp.bfloat16), wfb_ref[...],
                  preferred_element_type=jnp.float32)
        + bf_ref[...])


def tail_fused(feat, hid, pp):
    B = feat.shape[0]
    Cnp = pp["w_final_a"].shape[1]
    return pl.pallas_call(
        _tail_kernel,
        out_shape=jax.ShapeDtypeStruct((B, Cnp), jnp.float32),
        compiler_params=pltpu.CompilerParams(
            vmem_limit_bytes=32 * 1024 * 1024),
    )(feat, hid, pp["w_cnn_fc"], pp["b_cnn_fc"], pp["w_rnn_fc"],
      pp["b_rnn_fc"], pp["w_final_a"], pp["w_final_b"], pp["b_final"])


# ---------------------------------------------------------------------------
# Full CNN2RNN forward
# ---------------------------------------------------------------------------
def cnn2rnn_forward(pp, img, seq):
    B, Cin, Himg, Wimg = img.shape
    HW = Himg * Wimg
    Hp = pp["hidden_pad"]

    T, N, L = seq.shape            # T == B: LSTM time axis = dim 0, as in PyTorch
    Kp = pp["w_conv"].shape[0]
    Lp = pp["w_ih"].shape[0]
    Np = pp["w_rnn_fc"].shape[0] // Hp

    # Common row padding for the CNN-feature / RNN-hidden batch axes.
    t_chunk = min(_round_up(B, 8), 32)
    Bp = _round_up(B, t_chunk)

    # --- CNN encoder (ResNet50 surrogate): 3x3 conv + ReLU + GAP ----------
    patches = im2col_3x3(img).astype(jnp.bfloat16)        # (B, HW, Cin*9) bf16
    K = patches.shape[-1]
    tm = _pick_tm(HW, Kp, 2)
    HWp = _round_up(HW, tm)
    patches = jnp.pad(patches, ((0, 0), (0, HWp - HW), (0, Kp - K)))
    feat = conv_relu_gap(patches, pp["w_conv"], pp["b_conv"],
                         hw=HW, tm=tm, rows_out=Bp)        # (Bp, Cp)

    # --- RNN decoder: LSTM over dim 0, batch = num_features ----------------
    x = jnp.pad(seq, ((0, Bp - T), (0, Np - N), (0, Lp - L)))
    x2d = x.reshape(Bp * Np, Lp)
    hidden2d = lstm_fused(x2d, pp["w_ih"], pp["b_lstm"], pp["w_hh"],
                          n_pad=Np, t_chunk=t_chunk)       # (Bp*Np, Hp)
    hid = hidden2d.reshape(Bp, Np * Hp)

    # --- fused cnn_fc + rnn_fc + concat + final linear ----------------------
    out = tail_fused(feat, hid, pp)                        # (Bp, Cnp)
    # TODO(synk): nn.Dropout(rate) applied after final_layer -> identity (eval mode).
    return out[:B, :pp["class_n"]]


# ---------------------------------------------------------------------------
# Parameters: logical (module-shaped) init, then one-time padding / bf16 prep
# ---------------------------------------------------------------------------
def init_params(key, *, cin, cmid, num_features, max_len, embedding_dim, class_n):
    ks = jax.random.split(key, 12)

    def u(k, shape, fan_in):
        bound = 1.0 / jnp.sqrt(jnp.float32(fan_in))
        return jax.random.uniform(k, shape, jnp.float32, -bound, bound)

    H = embedding_dim
    return {
        # CNN surrogate
        "w_conv": u(ks[0], (cin * 9, cmid), cin * 9),
        "b_conv": u(ks[1], (1, cmid), cin * 9),
        "w_cnn_fc": u(ks[2], (cmid, 1000), cmid),
        "b_cnn_fc": u(ks[3], (1, 1000), cmid),
        # LSTM (input_size = max_len, hidden = embedding_dim); gate order i,f,g,o
        # (single combined bias == b_ih + b_hh of nn.LSTM, same forward math)
        "w_ih": u(ks[4], (max_len, 4 * H), max_len),
        "w_hh": u(ks[5], (H, 4 * H), H),
        "b_lstm": u(ks[6], (1, 4 * H), H),
        # rnn_fc: num_features*embedding_dim -> 1000
        "w_rnn_fc": u(ks[7], (num_features * H, 1000), num_features * H),
        "b_rnn_fc": u(ks[8], (1, 1000), num_features * H),
        # final layer: 1000 + 1000 -> class_n
        "w_final": u(ks[9], (2000, class_n), 2000),
        "b_final": u(ks[10], (1, class_n), 2000),
    }


def prepare_params(p, *, num_features, embedding_dim, class_n):
    H = embedding_dim
    N = num_features
    K = p["w_conv"].shape[0]
    Cmid = p["w_conv"].shape[1]
    L = p["w_ih"].shape[0]

    Kp = _round_up(K, 128)
    Cp = _round_up(Cmid, 128)
    Hp = _round_up(H, 128)
    Lp = _round_up(L, 128)
    Np = _round_up(N, 8)
    D1p = _round_up(1000, 128)                 # 1024
    Cnp = _round_up(class_n, 128)

    return {
        "hidden_pad": Hp,
        "class_n": class_n,
        # CNN
        "w_conv": _pad2(p["w_conv"], Kp, Cp).astype(jnp.bfloat16),
        "b_conv": _pad2(p["b_conv"], 1, Cp),
        "w_cnn_fc": _pad2(p["w_cnn_fc"], Cp, D1p).astype(jnp.bfloat16),
        "b_cnn_fc": _pad2(p["b_cnn_fc"], 1, D1p),
        # LSTM (gate blocks moved to Hp-aligned offsets, zero elsewhere)
        "w_ih": _pad2(_pad_gates(p["w_ih"], H, Hp), Lp, 4 * Hp).astype(jnp.bfloat16),
        "w_hh": _pad2(_pad_gates(p["w_hh"], H, Hp), Hp, 4 * Hp).astype(jnp.bfloat16),
        "b_lstm": _pad_gates(p["b_lstm"], H, Hp),
        # rnn_fc rearranged to consume the (T, Np*Hp) padded hidden layout
        "w_rnn_fc": _pad_rnn_fc(p["w_rnn_fc"], N, Np, H, Hp, D1p).astype(jnp.bfloat16),
        "b_rnn_fc": _pad2(p["b_rnn_fc"], 1, D1p),
        # final layer split for the fused concat+linear kernel
        "w_final_a": _pad2(p["w_final"][:1000], D1p, Cnp).astype(jnp.bfloat16),
        "w_final_b": _pad2(p["w_final"][1000:], D1p, Cnp).astype(jnp.bfloat16),
        "b_final": _pad2(p["b_final"], 1, Cnp),
    }


if __name__ == "__main__":
    # Small synthetic shapes consistent with the module's forward:
    B, Cin, Himg, Wimg = 2, 4, 16, 16          # img NCHW
    num_features, max_len = 4, 16              # seq: (B, num_features, max_len)
    embedding_dim, class_n, cmid = 32, 8, 64

    key = jax.random.PRNGKey(0)
    k_img, k_seq, k_par = jax.random.split(key, 3)

    img = jax.random.normal(k_img, (B, Cin, Himg, Wimg), jnp.float32)
    seq = jax.random.normal(k_seq, (B, num_features, max_len), jnp.float32)

    logical = init_params(
        k_par, cin=Cin, cmid=cmid, num_features=num_features,
        max_len=max_len, embedding_dim=embedding_dim, class_n=class_n,
    )
    params = prepare_params(
        logical, num_features=num_features,
        embedding_dim=embedding_dim, class_n=class_n,
    )

    out = cnn2rnn_forward(params, img, seq)
    out = jax.block_until_ready(out)
    assert out.shape == (B, class_n), out.shape
    print("KERNEL_OK")
</pallas_src>

<mosaic_0001>
module attributes {stable_mosaic.version = 11 : i64} {
  func.func @_conv_gap_kernel(%arg0: i32, %arg1: i32, %arg2: memref<1x256x128xbf16, #tpu.memory_space<vmem>>, %arg3: memref<128x128xbf16, #tpu.memory_space<vmem>>, %arg4: memref<1x128xf32, #tpu.memory_space<vmem>>, %arg5: memref<8x128xf32, #tpu.memory_space<vmem>>) attributes {dimension_semantics = [#tpu.dimension_semantics<arbitrary>, #tpu.dimension_semantics<arbitrary>], iteration_bounds = array<i64: 2, 1>, scalar_prefetch = 0 : i64, scratch_operands = 0 : i64, tpu.core_type = #tpu.core_type<tc>, window_params = [{transform_indices = @transform_0, window_bounds = array<i64: 1, 256, 128>}, {pipeline_mode = #tpu.pipeline_mode<synchronous>, transform_indices = @transform_1, window_bounds = array<i64: 128, 128>}, {pipeline_mode = #tpu.pipeline_mode<synchronous>, transform_indices = @transform_2, window_bounds = array<i64: 1, 128>}, {pipeline_mode = #tpu.pipeline_mode<synchronous>, transform_indices = @transform_3, window_bounds = array<i64: 8, 128>}]} {
    %c0_i32 = arith.constant 0 : i32
    %0 = arith.cmpi eq, %arg0, %c0_i32 : i32
    %c0_i32_0 = arith.constant 0 : i32
    %1 = arith.cmpi eq, %arg1, %c0_i32_0 : i32
    %2 = arith.andi %0, %1 : i1
    %3 = arith.extui %2 : i1 to i32
    %c0_i32_1 = arith.constant 0 : i32
    %4 = arith.cmpi ne, %3, %c0_i32_1 : i32
    scf.if %4 {
      %cst_18 = arith.constant 0.000000e+00 : f32
      %40 = vector.broadcast %cst_18 : f32 to vector<8x128xf32>
      %c0_19 = arith.constant 0 : index
      %c0_20 = arith.constant 0 : index
      %41 = vector.load %arg5[%c0_19, %c0_20] : memref<8x128xf32, #tpu.memory_space<vmem>>, vector<8x128xf32>
      tpu.vector_store %arg5[%c0_19, %c0_20], %40 {strides = array<i32>} : memref<8x128xf32, #tpu.memory_space<vmem>>, vector<8x128xf32>,
    } else {
    }
    %c0 = arith.constant 0 : index
    %c0_2 = arith.constant 0 : index
    %c0_3 = arith.constant 0 : index
    %5 = vector.load %arg2[%c0, %c0_2, %c0_3] : memref<1x256x128xbf16, #tpu.memory_space<vmem>>, vector<1x256x128xbf16>
    %6 = vector.shape_cast %5 : vector<1x256x128xbf16> to vector<256x128xbf16>
    %c0_4 = arith.constant 0 : index
    %c0_5 = arith.constant 0 : index
    %7 = vector.load %arg3[%c0_4, %c0_5] : memref<128x128xbf16, #tpu.memory_space<vmem>>, vector<128x128xbf16>
    %cst = arith.constant dense<0.000000e+00> : vector<256x128xf32>
    %8 = tpu.matmul %6, %7, %cst {dimension_numbers = #tpu.dot_dimension_numbers<[1], [0], [0], [1], [0, 0, 1, 1], [], []>} : vector<256x128xbf16>, vector<128x128xbf16>, vector<256x128xf32> -> vector<256x128xf32>
    %c0_6 = arith.constant 0 : index
    %c0_7 = arith.constant 0 : index
    %9 = vector.load %arg4[%c0_6, %c0_7] : memref<1x128xf32, #tpu.memory_space<vmem>>, vector<1x128xf32>
    %10 = vector.broadcast %9 : vector<1x128xf32> to vector<256x128xf32>
    %11 = arith.addf %8, %10 : vector<256x128xf32>
    %cst_8 = arith.constant 0.000000e+00 : f32
    %12 = vector.broadcast %cst_8 : f32 to vector<256x128xf32>
    %13 = arith.maximumf %11, %12 : vector<256x128xf32>
    %c256_i32 = arith.constant 256 : i32
    %14 = arith.muli %arg1, %c256_i32 : i32
    %15 = tpu.iota {dimensions = array<i32: 0>} : vector<256x1xi32>
    %16 = vector.broadcast %14 : i32 to vector<256x1xi32>
    %17 = arith.addi %16, %15 : vector<256x1xi32>
    %c256_i32_9 = arith.constant 256 : i32
    %18 = vector.broadcast %c256_i32_9 : i32 to vector<256x1xi32>
    %19 = arith.cmpi slt, %17, %18 : vector<256x1xi32>
    %cst_10 = arith.constant 0.000000e+00 : f32
    %20 = vector.shape_cast %19 : vector<256x1xi1> to vector<256x1xi1>
    %21 = vector.broadcast %20 : vector<256x1xi1> to vector<256x128xi1>
    %22 = vector.broadcast %cst_10 : f32 to vector<256x128xf32>
    %23 = arith.select %21, %13, %22 : vector<256x128xi1>, vector<256x128xf32>
    %cst_11 = arith.constant dense<0.000000e+00> : vector<128xf32>
    %24 = vector.multi_reduction <add>, %23, %cst_11 [0] : vector<256x128xf32> to vector<128xf32>
    %25 = vector.shape_cast %24 : vector<128xf32> to vector<1x128xf32>
    %cst_12 = arith.constant 3.906250e-03 : f32
    %26 = vector.broadcast %cst_12 : f32 to vector<1x128xf32>
    %27 = arith.mulf %25, %26 : vector<1x128xf32>
    %28 = tpu.iota {dimensions = array<i32: 0>} : vector<8x1xi32>
    %29 = vector.broadcast %arg0 : i32 to vector<8x1xi32>
    %30 = arith.cmpi eq, %28, %29 : vector<8x1xi32>
    %c0_13 = arith.constant 0 : index
    %c0_14 = arith.constant 0 : index
    %31 = vector.load %arg5[%c0_13, %c0_14] : memref<8x128xf32, #tpu.memory_space<vmem>>, vector<8x128xf32>
    %cst_15 = arith.constant 0.000000e+00 : f32
    %32 = vector.shape_cast %30 : vector<8x1xi1> to vector<8x1xi1>
    %33 = vector.broadcast %32 : vector<8x1xi1> to vector<8x128xi1>
    %34 = vector.shape_cast %27 : vector<1x128xf32> to vector<1x128xf32>
    %35 = vector.broadcast %34 : vector<1x128xf32> to vector<8x128xf32>
    %36 = vector.broadcast %cst_15 : f32 to vector<8x128xf32>
    %37 = arith.select %33, %35, %36 : vector<8x128xi1>, vector<8x128xf32>
    %38 = arith.addf %31, %37 : vector<8x128xf32>
    %c0_16 = arith.constant 0 : index
    %c0_17 = arith.constant 0 : index
    %39 = vector.load %arg5[%c0_16, %c0_17] : memref<8x128xf32, #tpu.memory_space<vmem>>, vector<8x128xf32>
    tpu.vector_store %arg5[%c0_16, %c0_17], %38 {strides = array<i32>} : memref<8x128xf32, #tpu.memory_space<vmem>>, vector<8x128xf32>,
    return
  }
  func.func @transform_0(%arg0: i32, %arg1: i32) -> (i32, i32, i32) {
    %c0_i32 = arith.constant 0 : i32
    %c0_i32_0 = arith.constant 0 : i32
    return %arg0, %arg1, %c0_i32 : i32, i32, i32
  }
  func.func @transform_1(%arg0: i32, %arg1: i32) -> (i32, i32) {
    %c0_i32 = arith.constant 0 : i32
    %c0_i32_0 = arith.constant 0 : i32
    %c0_i32_1 = arith.constant 0 : i32
    return %c0_i32, %c0_i32_0 : i32, i32
  }
  func.func @transform_2(%arg0: i32, %arg1: i32) -> (i32, i32) {
    %c0_i32 = arith.constant 0 : i32
    %c0_i32_0 = arith.constant 0 : i32
    %c0_i32_1 = arith.constant 0 : i32
    return %c0_i32, %c0_i32_0 : i32, i32
  }
  func.func @transform_3(%arg0: i32, %arg1: i32) -> (i32, i32) {
    %c0_i32 = arith.constant 0 : i32
    %c0_i32_0 = arith.constant 0 : i32
    %c0_i32_1 = arith.constant 0 : i32
    return %c0_i32, %c0_i32_0 : i32, i32
  }
}

</mosaic_0001>

<llo_original>
// kernel: tpu_custom_call.1
$region0: #{tpu_custom_call.1}
  #allocation0 [shape = 'u32[]', space=smem, size = 0x4, offset = 0x4, fixed_abs, tag = 'smem constant byte address 0x4 - core index']
  #allocation1 [shape = 'u32[144,128]{1,0:T(1,128)}', space=vmem, size = 0x12000, scoped, tag = 'internal scratch']
  %s0 = inlined_call_operand.hbm [shape: bf16[2,256,128], index: 0, kind: input, shape index: {}]
  %s1 = inlined_call_operand.hbm [shape: bf16[128,128], index: 1, kind: input, shape index: {}]
  %s2 = inlined_call_operand.vmem [shape: f32[1,128], index: 2, kind: input, shape index: {}]
  %s3 = inlined_call_operand.hbm [shape: f32[8,128], index: 3, kind: output, shape index: {}]
  %s4 = sld [smem:[#allocation0]]
  $region57: #{tpu_custom_call.1} parent=0
    _
  %s6 = ssub.s32 1, %s4
  %s7 = scalar_select 0, %s6, %s4
  $region1: #{tpu_custom_call.1} parent=0
    #allocation2 [shape = 'u8[131072]{0}', space=vmem, size = 0x20000, scoped, tag = 'input window, operand 0']
    #allocation3 [shape = 's32[2]{0}', space=sflag, size = 0x8, scoped, tag = 'scoped memory for tpu_custom_call.1']
    #allocation4 [shape = 's32[2]{0}', space=sflag, size = 0x8, scoped, tag = 'scoped memory for tpu_custom_call.1']
    #allocation5 [shape = 'u8[32768]{0}', space=vmem, size = 0x8000, scoped, tag = 'input window, operand 1, single buffered']
    #allocation6 [shape = 's32[1]{0}', space=sflag, size = 0x4, scoped, tag = 'scoped memory for tpu_custom_call.1']
    #allocation7 [shape = 'u8[4096]{0}', space=vmem, size = 0x1000, scoped, tag = 'output window, operand 0, single buffered']
    %8 = vsyncpa [#allocation3], 0
    %s9 = scalar_lea.sflag [#allocation3], 1
    %10 = vsyncpa %s9, 0
    %11 = vsyncpa [#allocation6], 0
    %12 = vsyncpa [#allocation4], 0
    loop: start=0, step=1, limit=4
    $region2: #{tpu_custom_call.1} parent=1 // loop_pre_header
      _
    $region3: #{tpu_custom_call.1} parent=1 // loop_header
      %s14 = sphi 0, %s18
      %p15 = scmp.ge.s32.totalorder %s14, 4
      %s21 = sphi 0, %s33
      %s22 = sphi 0, %s29
      %s23 = sphi 0, %s21
      %s24 = sphi 0, %s22
      %s25 = sphi 0, %s23
      %s26 = sphi 0, %s24
      %s38 = sphi 0, %s40
      %s41 = sphi 0, %s38
      %s42 = sphi 0, %s41
      %s58 = sphi 0, %s42
      %s62 = sphi 0, %s62
      %s64 = sphi 0, %s62
      %s65 = sphi 0, %s64
      %s79 = sphi 0, %s65
      %s83 = sphi 0, %s83
      %s85 = sphi 0, %s83
      %s86 = sphi 0, %s85
      %s100 = sphi 0, %s86
      %s104 = sphi 0, %s104
      %s106 = sphi 0, %s104
      %s107 = sphi 0, %s106
      %s121 = sphi 0, %s107
    $region4: #{tpu_custom_call.1} parent=1 // loop_header_branch
      %17 = sbr.rel (%p15) target = $region8
    $region5: #{tpu_custom_call.1} parent=1 // loop_body
      %s19 = ssub.s32 %s14, 1
      %s20 = ssub.s32 %s14, 2
      %s27 = sadd.s32 1, %s22
      %p28 = scmp.ge.s32.totalorder %s27, 1
      %s29 = scalar_select %p28, 0, %s27
      %s30 = sadd.s32 1, %s21
      %s31 = scalar_select %p28, %s30, %s21
      %p32 = scmp.ge.s32.totalorder %s31, 2
      %s33 = scalar_select %p32, 0, %s31
      %s34 = ssub.s32 %s21, %s33
      %s35 = ssub.s32 %s22, %s29
      %s36 = sor.u32 %s34, %s35
      %p37 = scmp.eq.s32.totalorder %s36, 0
      %s39 = sadd.s32 %s38, 1
      %s40 = scalar_select %p37, %s38, %s39
      %p43 = pneg %p37
      %p44 = scmp.eq.s32.totalorder %s14, 1
      %p45 = por %p43, %p44
      %p46 = scmp.ne.s32.totalorder %s38, %s41
      %p47 = scmp.eq.s32.totalorder %s14, 0
      %p48 = por %p46, %p47
      %p49 = scmp.ne.s32.totalorder %s38, %s41
      %p50 = scmp.eq.s32.totalorder %s19, 1
      %p51 = por %p49, %p50
      %p52 = scmp.ne.s32.totalorder %s41, %s42
      %p53 = scmp.eq.s32.totalorder %s19, 0
      %p54 = por %p52, %p53
      %p55 = scmp.ne.s32.totalorder %s41, %s42
      %p56 = scmp.eq.s32.totalorder %s20, 1
      %p57 = por %p55, %p56
      %p59 = scmp.ne.s32.totalorder %s42, %s58
      %p60 = scmp.eq.s32.totalorder %s20, 0
      %p61 = por %p59, %p60
      %s63 = sadd.s32 %s62, 1
      %p66 = scmp.eq.s32.totalorder %s14, 1
      %p67 = scmp.ne.s32.totalorder %s62, %s64
      %p68 = scmp.eq.s32.totalorder %s14, 0
      %p69 = por %p67, %p68
      %p70 = scmp.ne.s32.totalorder %s62, %s64
      %p71 = scmp.eq.s32.totalorder %s19, 1
      %p72 = por %p70, %p71
      %p73 = scmp.ne.s32.totalorder %s64, %s65
      %p74 = scmp.eq.s32.totalorder %s19, 0
      %p75 = por %p73, %p74
      %p76 = scmp.ne.s32.totalorder %s64, %s65
      %p77 = scmp.eq.s32.totalorder %s20, 1
      %p78 = por %p76, %p77
      %p80 = scmp.ne.s32.totalorder %s65, %s79
      %p81 = scmp.eq.s32.totalorder %s20, 0
      %p82 = por %p80, %p81
      %s84 = sadd.s32 %s83, 1
      %p87 = scmp.eq.s32.totalorder %s14, 1
      %p88 = scmp.ne.s32.totalorder %s83, %s85
      %p89 = scmp.eq.s32.totalorder %s14, 0
      %p90 = por %p88, %p89
      %p91 = scmp.ne.s32.totalorder %s83, %s85
      %p92 = scmp.eq.s32.totalorder %s19, 1
      %p93 = por %p91, %p92
      %p94 = scmp.ne.s32.totalorder %s85, %s86
      %p95 = scmp.eq.s32.totalorder %s19, 0
      %p96 = por %p94, %p95
      %p97 = scmp.ne.s32.totalorder %s85, %s86
      %p98 = scmp.eq.s32.totalorder %s20, 1
      %p99 = por %p97, %p98
      %p101 = scmp.ne.s32.totalorder %s86, %s100
      %p102 = scmp.eq.s32.totalorder %s20, 0
      %p103 = por %p101, %p102
      %s105 = sadd.s32 %s104, 1
      %p108 = scmp.eq.s32.totalorder %s14, 1
      %p109 = scmp.ne.s32.totalorder %s104, %s106
      %p110 = scmp.eq.s32.totalorder %s14, 0
      %p111 = por %p109, %p110
      %p112 = scmp.ne.s32.totalorder %s104, %s106
      %p113 = scmp.eq.s32.totalorder %s19, 1
      %p114 = por %p112, %p113
      %p115 = scmp.ne.s32.totalorder %s106, %s107
      %p116 = scmp.eq.s32.totalorder %s19, 0
      %p117 = por %p115, %p116
      %p118 = scmp.ne.s32.totalorder %s106, %s107
      %p119 = scmp.eq.s32.totalorder %s20, 1
      %p120 = por %p118, %p119
      %p122 = scmp.ne.s32.totalorder %s107, %s121
      %p123 = scmp.eq.s32.totalorder %s20, 0
      %p124 = por %p122, %p123
      %p125 = scmp.le.s32.totalorder 1, %s14
      %p126 = scmp.lt.s32.totalorder %s14, 3
      %p127 = pnand %p125, %p126
      %p128 = pneg %p127
      // Predicated region
      $region9: #{tpu_custom_call.1} parent=5 // pred_check
        _
      $region10: #{tpu_custom_call.1} parent=5 // pred_check_branch
        %130 = sbr.rel (%p127) target = $region12
      $region11: #{tpu_custom_call.1} parent=5 // pred_region
        %s131 = ssub.s32 %s14, 1
        // Predicated region
        $region13: #{tpu_custom_call.1} parent=11 // pred_check
          %p132 = pneg %p75
        $region14: #{tpu_custom_call.1} parent=11 // pred_check_branch
          %134 = sbr.rel (%p132) target = $region16
        $region15: #{tpu_custom_call.1} parent=11 // pred_region
          %s136 = ssub.s32 1024, 1024
          %137 = vsyncadd [#allocation6], %s136
          %s138 = sshll.u32 [#allocation5], 4
          %s139 = int_to_ptr.vmem [resolvable:$true] %s138
          %144 = dma.hbm_to_vmem [thread:$0]  %s1, 1024, %s139, [#allocation6], 64, 64, 4
        $region16: #{tpu_custom_call.1} parent=11 // pred_fallthru
          _
        // Predicated region
        $region17: #{tpu_custom_call.1} parent=11 // pred_check
          %p145 = pneg %p96
        $region18: #{tpu_custom_call.1} parent=11 // pred_check_branch
          %147 = sbr.rel (%p145) target = $region20
        $region19: #{tpu_custom_call.1} parent=11 // pred_region
          _
        $region20: #{tpu_custom_call.1} parent=11 // pred_fallthru
          _
      $region12: #{tpu_custom_call.1} parent=5 // pred_fallthru
        _
      %p148 = scmp.lt.s32.totalorder %s14, 2
      // Predicated region
      $region21: #{tpu_custom_call.1} parent=5 // pred_check
        %p149 = pneg %p148
      $region22: #{tpu_custom_call.1} parent=5 // pred_check_branch
        %151 = sbr.rel (%p149) target = $region24
      $region23: #{tpu_custom_call.1} parent=5 // pred_region
        // Predicated region
        $region25: #{tpu_custom_call.1} parent=23 // pred_check
          %p152 = pneg %p48
        $region26: #{tpu_custom_call.1} parent=23 // pred_check_branch
          %154 = sbr.rel (%p152) target = $region28
        $region27: #{tpu_custom_call.1} parent=23 // pred_region
          %s155 = sand.u32 %s38, 1
          %s156 = scalar_lea.sflag [#allocation3], %s155
          %s157 = sand.u32 %s38, 1
          %s158 = smul.addr %s157, 128
          %s159 = scalar_lea.vmem [#allocation2], %s158
          %s160 = smul.u32 32, %s22
          %s162 = ssub.s32 2048, 2048
          %163 = vsyncadd %s156, %s162
          %s164 = smul.addr %s21, 32
          %s165 = sadd.s32 %s160, %s164
          %s166 = smul.addr %s165, 64
          %s167 = scalar_lea.hbm %s0, %s166
          %s168 = sshll.u32 %s159, 4
          %s169 = int_to_ptr.vmem [resolvable:$true] %s168
          %174 = dma.hbm_to_vmem [thread:$0]  %s167, 2048, %s169, %s156, 64, 64, 4
        $region28: #{tpu_custom_call.1} parent=23 // pred_fallthru
          _
      $region24: #{tpu_custom_call.1} parent=5 // pred_fallthru
        _
      %p175 = scmp.le.s32.totalorder 1, %s14
      %p176 = scmp.lt.s32.totalorder %s14, 3
      %p177 = pnand %p175, %p176
      %p178 = pneg %p177
      // Predicated region
      $region29: #{tpu_custom_call.1} parent=5 // pred_check
        _
      $region30: #{tpu_custom_call.1} parent=5 // pred_check_branch
        %180 = sbr.rel (%p177) target = $region32
      $region31: #{tpu_custom_call.1} parent=5 // pred_region
        %s181 = ssub.s32 %s14, 1
        %s182 = sand.u32 %s41, 1
        %s183 = scalar_lea.sflag [#allocation3], %s182
        %s184 = sand.u32 %s41, 1
        %s185 = smul.addr %s184, 128
        %s186 = scalar_lea.vmem [#allocation2], %s185
        // Predicated region
        $region33: #{tpu_custom_call.1} parent=31 // pred_check
          %p187 = pneg %p54
        $region34: #{tpu_custom_call.1} parent=31 // pred_check_branch
          %189 = sbr.rel (%p187) target = $region36
        $region35: #{tpu_custom_call.1} parent=31 // pred_region
          %190 = dma.done %s183, 2048
        $region36: #{tpu_custom_call.1} parent=31 // pred_fallthru
          _
        // Predicated region
        $region37: #{tpu_custom_call.1} parent=31 // pred_check
          %p191 = pneg %p75
        $region38: #{tpu_custom_call.1} parent=31 // pred_check_branch
          %193 = sbr.rel (%p191) target = $region40
        $region39: #{tpu_custom_call.1} parent=31 // pred_region
          %194 = dma.done [#allocation6], 1024
        $region40: #{tpu_custom_call.1} parent=31 // pred_fallthru
          _
        %s195 = sand.u32 %s41, 1
        %s196 = scalar_lea.sflag [#allocation3], %s195
        %s197 = sand.u32 %s41, 1
        %s198 = smul.addr %s197, 128
        %s199 = scalar_lea.vmem [#allocation2], %s198
        %p200 = pneg %p54
        %p201 = pneg %p51
        %p202 = pneg %p75
        %p203 = pneg %p72
        %p204 = pneg %p96
        %p205 = pneg %p93
        %p206 = pneg %p117
        %p207 = pneg %p114
        %s208 = smul.u32 32, %s24
        %p210 = scmp.eq.s32.totalorder %s23, 0
        %p211 = scmp.eq.s32.totalorder %s24, 0
        %p212 = pnand %p210, %p211
        %p213 = pneg %p212
        // Predicated region
        $region41: #{tpu_custom_call.1} parent=31 // pred_check
          _
        $region42: #{tpu_custom_call.1} parent=31 // pred_check_branch
          %215 = sbr.rel (%p212) target = $region44
        $region43: #{tpu_custom_call.1} parent=31 // pred_region
          %216 = vst [vmem:[#allocation7] sm:$0xff] 0.0
        $region44: #{tpu_custom_call.1} parent=31 // pred_fallthru
          _
        %v217 = vld [vmem:[%s186] sm:$0xf]
        %v218 = vld [vmem:[%s186 + $0x4] sm:$0xf]
        %v219 = vld [vmem:[%s186 + $0x8] sm:$0xf]
        %v220 = vld [vmem:[%s186 + $0xc] sm:$0xf]
        %v221 = vld [vmem:[%s186 + $0x10] sm:$0xf]
        %v222 = vld [vmem:[%s186 + $0x14] sm:$0xf]
        %v223 = vld [vmem:[%s186 + $0x18] sm:$0xf]
        %v224 = vld [vmem:[%s186 + $0x1c] sm:$0xf]
        %v225 = vld [vmem:[%s186 + $0x20] sm:$0xf]
        %v226 = vld [vmem:[%s186 + $0x24] sm:$0xf]
        %v227 = vld [vmem:[%s186 + $0x28] sm:$0xf]
        %v228 = vld [vmem:[%s186 + $0x2c] sm:$0xf]
        %v229 = vld [vmem:[%s186 + $0x30] sm:$0xf]
        %v230 = vld [vmem:[%s186 + $0x34] sm:$0xf]
        %v231 = vld [vmem:[%s186 + $0x38] sm:$0xf]
        %v232 = vld [vmem:[%s186 + $0x3c] sm:$0xf]
        %v233 = vld [vmem:[%s186 + $0x40] sm:$0xf]
        %v234 = vld [vmem:[%s186 + $0x44] sm:$0xf]
        %v235 = vld [vmem:[%s186 + $0x48] sm:$0xf]
        %v236 = vld [vmem:[%s186 + $0x4c] sm:$0xf]
        %v237 = vld [vmem:[%s186 + $0x50] sm:$0xf]
        %v238 = vld [vmem:[%s186 + $0x54] sm:$0xf]
        %v239 = vld [vmem:[%s186 + $0x58] sm:$0xf]
        %v240 = vld [vmem:[%s186 + $0x5c] sm:$0xf]
        %v241 = vld [vmem:[%s186 + $0x60] sm:$0xf]
        %v242 = vld [vmem:[%s186 + $0x64] sm:$0xf]
        %v243 = vld [vmem:[%s186 + $0x68] sm:$0xf]
        %v244 = vld [vmem:[%s186 + $0x6c] sm:$0xf]
        %v245 = vld [vmem:[%s186 + $0x70] sm:$0xf]
        %v246 = vld [vmem:[%s186 + $0x74] sm:$0xf]
        %v247 = vld [vmem:[%s186 + $0x78] sm:$0xf]
        %v248 = vld [vmem:[%s186 + $0x7c] sm:$0xf]
        %v249 = vld [vmem:[#allocation5] sm:$0xf]
        %v250 = vld [vmem:[#allocation5 + $0x4] sm:$0xf]
        %v251 = vld [vmem:[#allocation5 + $0x8] sm:$0xf]
        %v252 = vld [vmem:[#allocation5 + $0xc] sm:$0xf]
        %v253 = vld [vmem:[#allocation5 + $0x10] sm:$0xf]
        %v254 = vld [vmem:[#allocation5 + $0x14] sm:$0xf]
        %v255 = vld [vmem:[#allocation5 + $0x18] sm:$0xf]
        %v256 = vld [vmem:[#allocation5 + $0x1c] sm:$0xf]
        %v257 = vld [vmem:[#allocation5 + $0x20] sm:$0xf]
        %v258 = vld [vmem:[#allocation5 + $0x24] sm:$0xf]
        %v259 = vld [vmem:[#allocation5 + $0x28] sm:$0xf]
        %v260 = vld [vmem:[#allocation5 + $0x2c] sm:$0xf]
        %v261 = vld [vmem:[#allocation5 + $0x30] sm:$0xf]
        %v262 = vld [vmem:[#allocation5 + $0x34] sm:$0xf]
        %v263 = vld [vmem:[#allocation5 + $0x38] sm:$0xf]
        %v264 = vld [vmem:[#allocation5 + $0x3c] sm:$0xf]
        %v265 = vld [vmem:[%s2] sm:$0x1]
        %v267 = vlaneseq
        %v268 = vshrl.u32 %v267, 7
        %v269 = vsub.s32 0, %v268
        %v270 = vrot.slane %v265, %v269
        %v304 = vunpack.c.l.b16 %v217
        %v305 = vunpack.c.l.b16 %v218
        %v306 = vunpack.c.l.b16 %v219
        %v307 = vunpack.c.l.b16 %v220
        %v308 = vunpack.c.l.b16 %v221
        %v309 = vunpack.c.l.b16 %v222
        %v310 = vunpack.c.l.b16 %v223
        %v311 = vunpack.c.l.b16 %v224
        %v312 = vunpack.c.l.b16 %v225
        %v313 = vunpack.c.l.b16 %v226
        %v314 = vunpack.c.l.b16 %v227
        %v315 = vunpack.c.l.b16 %v228
        %v316 = vunpack.c.l.b16 %v229
        %v317 = vunpack.c.l.b16 %v230
        %v318 = vunpack.c.l.b16 %v231
        %v319 = vunpack.c.l.b16 %v232
        %v320 = vunpack.c.l.b16 %v233
        %v321 = vunpack.c.l.b16 %v234
        %v322 = vunpack.c.l.b16 %v235
        %v323 = vunpack.c.l.b16 %v236
        %v324 = vunpack.c.l.b16 %v237
        %v325 = vunpack.c.l.b16 %v238
        %v326 = vunpack.c.l.b16 %v239
        %v327 = vunpack.c.l.b16 %v240
        %v328 = vunpack.c.l.b16 %v241
        %v329 = vunpack.c.l.b16 %v242
        %v330 = vunpack.c.l.b16 %v243
        %v331 = vunpack.c.l.b16 %v244
        %v332 = vunpack.c.l.b16 %v245
        %v333 = vunpack.c.l.b16 %v246
        %v334 = vunpack.c.l.b16 %v247
        %v335 = vunpack.c.l.b16 %v248
        %v336 = vpack.c.b16 %v305, %v304
        %v337 = vpack.c.b16 %v307, %v306
        %v338 = vpack.c.b16 %v309, %v308
        %v339 = vpack.c.b16 %v311, %v310
        %v340 = vpack.c.b16 %v313, %v312
        %v341 = vpack.c.b16 %v315, %v314
        %v342 = vpack.c.b16 %v317, %v316
        %v343 = vpack.c.b16 %v319, %v318
        %v344 = vpack.c.b16 %v321, %v320
        %v345 = vpack.c.b16 %v323, %v322
        %v346 = vpack.c.b16 %v325, %v324
        %v347 = vpack.c.b16 %v327, %v326
        %v348 = vpack.c.b16 %v329, %v328
        %v349 = vpack.c.b16 %v331, %v330
        %v350 = vpack.c.b16 %v333, %v332
        %v351 = vpack.c.b16 %v335, %v334
        %v384 = vunpack.c.l.b16 %v249
        %v385 = vunpack.c.l.b16 %v250
        %v386 = vunpack.c.l.b16 %v251
        %v387 = vunpack.c.l.b16 %v252
        %v388 = vunpack.c.l.b16 %v253
        %v389 = vunpack.c.l.b16 %v254
        %v390 = vunpack.c.l.b16 %v255
        %v391 = vunpack.c.l.b16 %v256
        %v392 = vunpack.c.l.b16 %v257
        %v393 = vunpack.c.l.b16 %v258
        %v394 = vunpack.c.l.b16 %v259
        %v395 = vunpack.c.l.b16 %v260
        %v396 = vunpack.c.l.b16 %v261
        %v397 = vunpack.c.l.b16 %v262
        %v398 = vunpack.c.l.b16 %v263
        %v399 = vunpack.c.l.b16 %v264
        %v400 = vpack.c.b16 %v385, %v384
        %v401 = vpack.c.b16 %v387, %v386
        %v402 = vpack.c.b16 %v389, %v388
        %v403 = vpack.c.b16 %v391, %v390
        %v404 = vpack.c.b16 %v393, %v392
        %v405 = vpack.c.b16 %v395, %v394
        %v406 = vpack.c.b16 %v397, %v396
        %v407 = vpack.c.b16 %v399, %v398
        %416 = vmatprep.subr.bf16.mxu0 0
        %417 = vmatpush1.bf16.msra.mxu0 %v400
        %418 = vmatprep.subr.bf16.mxu0 0
        %419 = vmatpush1.bf16.msra.mxu0 %v401
        %420 = vmatprep.subr.bf16.mxu0 0
        %421 = vmatpush1.bf16.msra.mxu0 %v402
        %422 = vmatprep.subr.bf16.mxu0 0
        %423 = vmatpush1.bf16.msra.mxu0 %v403
        %424 = vmatprep.subr.bf16.mxu0 0
        %425 = vmatpush1.bf16.msra.mxu0 %v404
        %426 = vmatprep.subr.bf16.mxu0 0
        %427 = vmatpush1.bf16.msra.mxu0 %v405
        %428 = vmatprep.subr.bf16.mxu0 0
        %429 = vmatpush1.bf16.msra.mxu0 %v406
        %430 = vmatprep.subr.bf16.mxu0 0
        %431 = vmatpush1.bf16.msra.mxu0 %v407
        %432 = vmatprep.subr.bf16.mxu0 0
        %433 = vmatpush1.bf16.msra.mxu0 0
        %434 = vmatprep.subr.bf16.mxu0 0
        %435 = vmatpush1.bf16.msra.mxu0 0
        %436 = vmatprep.subr.bf16.mxu0 0
        %437 = vmatpush1.bf16.msra.mxu0 0
        %438 = vmatprep.subr.bf16.mxu0 0
        %439 = vmatpush1.bf16.msra.mxu0 0
        %440 = vmatprep.subr.bf16.mxu0 0
        %441 = vmatpush1.bf16.msra.mxu0 0
        %442 = vmatprep.subr.bf16.mxu0 0
        %443 = vmatpush1.bf16.msra.mxu0 0
        %444 = vmatprep.subr.bf16.mxu0 0
        %445 = vmatpush1.bf16.msra.mxu0 0
        %446 = vmatprep.subr.bf16.mxu0 0
        %447 = vmatpush1.bf16.msra.mxu0 0
        %448 = vmatprep.mubr.bf16.mxu0 0
        %449 = vmatmul.mubr.bf16.gmra.mrb[0].mxu0 %v336
        %v450 = vpop.f32.mrb[0].mxu0
        %v451 = vadd.f32 %v270, %v450
        %v452 = vpop.f32.mrb[0].mxu0
        %v453 = vpop.f32.mrb[0].mxu0
        %v454 = vadd.f32 %v270, %v453
        %v455 = vpop.f32.mrb[0].mxu0
        %456 = vmatprep.mubr.bf16.mxu0 0
        %457 = vmatmul.mubr.bf16.gmra.mrb[0].mxu0 %v337
        %v458 = vpop.f32.mrb[0].mxu0
        %v459 = vadd.f32 %v270, %v458
        %v460 = vpop.f32.mrb[0].mxu0
        %v461 = vpop.f32.mrb[0].mxu0
        %v462 = vadd.f32 %v270, %v461
        %v463 = vpop.f32.mrb[0].mxu0
        %464 = vmatprep.mubr.bf16.mxu0 0
        %465 = vmatmul.mubr.bf16.gmra.mrb[0].mxu0 %v338
        %v466 = vpop.f32.mrb[0].mxu0
        %v467 = vadd.f32 %v270, %v466
        %v468 = vpop.f32.mrb[0].mxu0
        %v469 = vpop.f32.mrb[0].mxu0
        %v470 = vadd.f32 %v270, %v469
        %v471 = vpop.f32.mrb[0].mxu0
        %472 = vmatprep.mubr.bf16.mxu0 0
        %473 = vmatmul.mubr.bf16.gmra.mrb[0].mxu0 %v339
        %v474 = vpop.f32.mrb[0].mxu0
        %v475 = vadd.f32 %v270, %v474
        %v476 = vpop.f32.mrb[0].mxu0
        %v477 = vpop.f32.mrb[0].mxu0
        %v478 = vadd.f32 %v270, %v477
        %v479 = vpop.f32.mrb[0].mxu0
        %480 = vmatprep.mubr.bf16.mxu0 0
        %481 = vmatmul.mubr.bf16.gmra.mrb[0].mxu0 %v340
        %v482 = vpop.f32.mrb[0].mxu0
        %v483 = vadd.f32 %v270, %v482
        %v484 = vpop.f32.mrb[0].mxu0
        %v485 = vpop.f32.mrb[0].mxu0
        %v486 = vadd.f32 %v270, %v485
        %v487 = vpop.f32.mrb[0].mxu0
        %488 = vmatprep.mubr.bf16.mxu0 0
        %489 = vmatmul.mubr.bf16.gmra.mrb[0].mxu0 %v341
        %v490 = vpop.f32.mrb[0].mxu0
        %v491 = vadd.f32 %v270, %v490
        %v492 = vpop.f32.mrb[0].mxu0
        %v493 = vpop.f32.mrb[0].mxu0
        %v494 = vadd.f32 %v270, %v493
        %v495 = vpop.f32.mrb[0].mxu0
        %496 = vmatprep.mubr.bf16.mxu0 0
        %497 = vmatmul.mubr.bf16.gmra.mrb[0].mxu0 %v342
        %v498 = vpop.f32.mrb[0].mxu0
        %v499 = vadd.f32 %v270, %v498
        %v500 = vpop.f32.mrb[0].mxu0
        %v501 = vpop.f32.mrb[0].mxu0
        %v502 = vadd.f32 %v270, %v501
        %v503 = vpop.f32.mrb[0].mxu0
        %504 = vmatprep.mubr.bf16.mxu0 0
        %505 = vmatmul.mubr.bf16.gmra.mrb[0].mxu0 %v343
        %v506 = vpop.f32.mrb[0].mxu0
        %v507 = vadd.f32 %v270, %v506
        %v508 = vpop.f32.mrb[0].mxu0
        %v509 = vpop.f32.mrb[0].mxu0
        %v510 = vadd.f32 %v270, %v509
        %v511 = vpop.f32.mrb[0].mxu0
        %512 = vmatprep.mubr.bf16.mxu0 0
        %513 = vmatmul.mubr.bf16.gmra.mrb[0].mxu0 %v344
        %v514 = vpop.f32.mrb[0].mxu0
        %v515 = vadd.f32 %v270, %v514
        %v516 = vpop.f32.mrb[0].mxu0
        %v517 = vpop.f32.mrb[0].mxu0
        %v518 = vadd.f32 %v270, %v517
        %v519 = vpop.f32.mrb[0].mxu0
        %520 = vmatprep.mubr.bf16.mxu0 0
        %521 = vmatmul.mubr.bf16.gmra.mrb[0].mxu0 %v345
        %v522 = vpop.f32.mrb[0].mxu0
        %v523 = vadd.f32 %v270, %v522
        %v524 = vpop.f32.mrb[0].mxu0
        %v525 = vpop.f32.mrb[0].mxu0
        %v526 = vadd.f32 %v270, %v525
        %v527 = vpop.f32.mrb[0].mxu0
        %528 = vmatprep.mubr.bf16.mxu0 0
        %529 = vmatmul.mubr.bf16.gmra.mrb[0].mxu0 %v346
        %v530 = vpop.f32.mrb[0].mxu0
        %v531 = vadd.f32 %v270, %v530
        %v532 = vpop.f32.mrb[0].mxu0
        %v533 = vpop.f32.mrb[0].mxu0
        %v534 = vadd.f32 %v270, %v533
        %v535 = vpop.f32.mrb[0].mxu0
        %536 = vmatprep.mubr.bf16.mxu0 0
        %537 = vmatmul.mubr.bf16.gmra.mrb[0].mxu0 %v347
        %v538 = vpop.f32.mrb[0].mxu0
        %v539 = vadd.f32 %v270, %v538
        %v540 = vpop.f32.mrb[0].mxu0
        %v541 = vpop.f32.mrb[0].mxu0
        %v542 = vadd.f32 %v270, %v541
        %v543 = vpop.f32.mrb[0].mxu0
        %544 = vmatprep.mubr.bf16.mxu0 0
        %545 = vmatmul.mubr.bf16.gmra.mrb[0].mxu0 %v348
        %v546 = vpop.f32.mrb[0].mxu0
        %v547 = vadd.f32 %v270, %v546
        %v548 = vpop.f32.mrb[0].mxu0
        %v549 = vpop.f32.mrb[0].mxu0
        %v550 = vadd.f32 %v270, %v549
        %v551 = vpop.f32.mrb[0].mxu0
        %552 = vmatprep.mubr.bf16.mxu0 0
        %553 = vmatmul.mubr.bf16.gmra.mrb[0].mxu0 %v349
        %v554 = vpop.f32.mrb[0].mxu0
        %v555 = vadd.f32 %v270, %v554
        %v556 = vpop.f32.mrb[0].mxu0
        %v557 = vpop.f32.mrb[0].mxu0
        %v558 = vadd.f32 %v270, %v557
        %v559 = vpop.f32.mrb[0].mxu0
        %560 = vmatprep.mubr.bf16.mxu0 0
        %561 = vmatmul.mubr.bf16.gmra.mrb[0].mxu0 %v350
        %v562 = vpop.f32.mrb[0].mxu0
        %v563 = vadd.f32 %v270, %v562
        %v564 = vpop.f32.mrb[0].mxu0
        %v565 = vpop.f32.mrb[0].mxu0
        %v566 = vadd.f32 %v270, %v565
        %v567 = vpop.f32.mrb[0].mxu0
        %568 = vmatprep.mubr.bf16.mxu0 0
        %569 = vmatmul.mubr.bf16.gmra.mrb[0].mxu0 %v351
        %v570 = vpop.f32.mrb[0].mxu0
        %v571 = vadd.f32 %v270, %v570
        %v572 = vpop.f32.mrb[0].mxu0
        %v573 = vpop.f32.mrb[0].mxu0
        %v574 = vadd.f32 %v270, %v573
        %v575 = vpop.f32.mrb[0].mxu0
        %576 = vdwg.mxu0
        %v577 = vmax.f32 %v451, 0.0
        %v578 = vmax.f32 %v454, 0.0
        %v579 = vmax.f32 %v459, 0.0
        %v580 = vmax.f32 %v462, 0.0
        %v581 = vmax.f32 %v467, 0.0
        %v582 = vmax.f32 %v470, 0.0
        %v583 = vmax.f32 %v475, 0.0
        %v584 = vmax.f32 %v478, 0.0
        %v585 = vmax.f32 %v483, 0.0
        %v586 = vmax.f32 %v486, 0.0
        %v587 = vmax.f32 %v491, 0.0
        %v588 = vmax.f32 %v494, 0.0
        %v589 = vmax.f32 %v499, 0.0
        %v590 = vmax.f32 %v502, 0.0
        %v591 = vmax.f32 %v507, 0.0
        %v592 = vmax.f32 %v510, 0.0
        %v593 = vmax.f32 %v515, 0.0
        %v594 = vmax.f32 %v518, 0.0
        %v595 = vmax.f32 %v523, 0.0
        %v596 = vmax.f32 %v526, 0.0
        %v597 = vmax.f32 %v531, 0.0
        %v598 = vmax.f32 %v534, 0.0
        %v599 = vmax.f32 %v539, 0.0
        %v600 = vmax.f32 %v542, 0.0
        %v601 = vmax.f32 %v547, 0.0
        %v602 = vmax.f32 %v550, 0.0
        %v603 = vmax.f32 %v555, 0.0
        %v604 = vmax.f32 %v558, 0.0
        %v605 = vmax.f32 %v563, 0.0
        %v606 = vmax.f32 %v566, 0.0
        %v607 = vmax.f32 %v571, 0.0
        %v608 = vmax.f32 %v574, 0.0
        %s609 = smul.u32 %s24, 256
        %v610 = vlaneseq
        %v611 = vshrl.u32 %v610, 7
        %v612 = vadd.s32 %v611, 8
        %v613 = vadd.s32 %v611, 16
        %v614 = vadd.s32 %v611, 24
        %v615 = vadd.s32 %v611, 32
        %v616 = vadd.s32 %v611, 40
        %v617 = vadd.s32 %v611, 48
        %v618 = vadd.s32 %v611, 56
        %v619 = vadd.s32 %v611, 64
        %v620 = vadd.s32 %v611, 72
        %v621 = vadd.s32 %v611, 80
        %v622 = vadd.s32 %v611, 88
        %v623 = vadd.s32 %v611, 96
        %v624 = vadd.s32 %v611, 104
        %v625 = vadd.s32 %v611, 112
        %v626 = vadd.s32 %v611, 120
        %v627 = vadd.s32 %v611, 128
        %v628 = vadd.s32 %v611, 136
        %v629 = vadd.s32 %v611, 144
        %v630 = vadd.s32 %v611, 152
        %v631 = vadd.s32 %v611, 160
        %v632 = vadd.s32 %v611, 168
        %v633 = vadd.s32 %v611, 176
        %v634 = vadd.s32 %v611, 184
        %v635 = vadd.s32 %v611, 192
        %v636 = vadd.s32 %v611, 200
        %v637 = vadd.s32 %v611, 208
        %v638 = vadd.s32 %v611, 216
        %v639 = vadd.s32 %v611, 224
        %v640 = vadd.s32 %v611, 232
        %v641 = vadd.s32 %v611, 240
        %v642 = vadd.s32 %v611, 248
        %v643 = vstv %s609
        %v644 = vadd.s32 %v643, %v611
        %v645 = vadd.s32 %v643, %v612
        %v646 = vadd.s32 %v643, %v613
        %v647 = vadd.s32 %v643, %v614
        %v648 = vadd.s32 %v643, %v615
        %v649 = vadd.s32 %v643, %v616
        %v650 = vadd.s32 %v643, %v617
        %v651 = vadd.s32 %v643, %v618
        %v652 = vadd.s32 %v643, %v619
        %v653 = vadd.s32 %v643, %v620
        %v654 = vadd.s32 %v643, %v621
        %v655 = vadd.s32 %v643, %v622
        %v656 = vadd.s32 %v643, %v623
        %v657 = vadd.s32 %v643, %v624
        %v658 = vadd.s32 %v643, %v625
        %v659 = vadd.s32 %v643, %v626
        %v660 = vadd.s32 %v643, %v627
        %v661 = vadd.s32 %v643, %v628
        %v662 = vadd.s32 %v643, %v629
        %v663 = vadd.s32 %v643, %v630
        %v664 = vadd.s32 %v643, %v631
        %v665 = vadd.s32 %v643, %v632
        %v666 = vadd.s32 %v643, %v633
        %v667 = vadd.s32 %v643, %v634
        %v668 = vadd.s32 %v643, %v635
        %v669 = vadd.s32 %v643, %v636
        %v670 = vadd.s32 %v643, %v637
        %v671 = vadd.s32 %v643, %v638
        %v672 = vadd.s32 %v643, %v639
        %v673 = vadd.s32 %v643, %v640
        %v674 = vadd.s32 %v643, %v641
        %v675 = vadd.s32 %v643, %v642
        %vm676 = vcmp.lt.s32.totalorder %v644, 256
        %vm677 = vcmp.lt.s32.totalorder %v645, 256
        %vm678 = vcmp.lt.s32.totalorder %v646, 256
        %vm679 = vcmp.lt.s32.totalorder %v647, 256
        %vm680 = vcmp.lt.s32.totalorder %v648, 256
        %vm681 = vcmp.lt.s32.totalorder %v649, 256
        %vm682 = vcmp.lt.s32.totalorder %v650, 256
        %vm683 = vcmp.lt.s32.totalorder %v651, 256
        %vm684 = vcmp.lt.s32.totalorder %v652, 256
        %vm685 = vcmp.lt.s32.totalorder %v653, 256
        %vm686 = vcmp.lt.s32.totalorder %v654, 256
        %vm687 = vcmp.lt.s32.totalorder %v655, 256
        %vm688 = vcmp.lt.s32.totalorder %v656, 256
        %vm689 = vcmp.lt.s32.totalorder %v657, 256
        %vm690 = vcmp.lt.s32.totalorder %v658, 256
        %vm691 = vcmp.lt.s32.totalorder %v659, 256
        %vm692 = vcmp.lt.s32.totalorder %v660, 256
        %vm693 = vcmp.lt.s32.totalorder %v661, 256
        %vm694 = vcmp.lt.s32.totalorder %v662, 256
        %vm695 = vcmp.lt.s32.totalorder %v663, 256
        %vm696 = vcmp.lt.s32.totalorder %v664, 256
        %vm697 = vcmp.lt.s32.totalorder %v665, 256
        %vm698 = vcmp.lt.s32.totalorder %v666, 256
        %vm699 = vcmp.lt.s32.totalorder %v667, 256
        %vm700 = vcmp.lt.s32.totalorder %v668, 256
        %vm701 = vcmp.lt.s32.totalorder %v669, 256
        %vm702 = vcmp.lt.s32.totalorder %v670, 256
        %vm703 = vcmp.lt.s32.totalorder %v671, 256
        %vm704 = vcmp.lt.s32.totalorder %v672, 256
        %vm705 = vcmp.lt.s32.totalorder %v673, 256
        %vm706 = vcmp.lt.s32.totalorder %v674, 256
        %vm707 = vcmp.lt.s32.totalorder %v675, 256
        %v708 = vsel %vm676, 1, 0
        %v709 = vsel %vm677, 1, 0
        %v710 = vsel %vm678, 1, 0
        %v711 = vsel %vm679, 1, 0
        %v712 = vsel %vm680, 1, 0
        %v713 = vsel %vm681, 1, 0
        %v714 = vsel %vm682, 1, 0
        %v715 = vsel %vm683, 1, 0
        %v716 = vsel %vm684, 1, 0
        %v717 = vsel %vm685, 1, 0
        %v718 = vsel %vm686, 1, 0
        %v719 = vsel %vm687, 1, 0
        %v720 = vsel %vm688, 1, 0
        %v721 = vsel %vm689, 1, 0
        %v722 = vsel %vm690, 1, 0
        %v723 = vsel %vm691, 1, 0
        %v724 = vsel %vm692, 1, 0
        %v725 = vsel %vm693, 1, 0
        %v726 = vsel %vm694, 1, 0
        %v727 = vsel %vm695, 1, 0
        %v728 = vsel %vm696, 1, 0
        %v729 = vsel %vm697, 1, 0
        %v730 = vsel %vm698, 1, 0
        %v731 = vsel %vm699, 1, 0
        %v732 = vsel %vm700, 1, 0
        %v733 = vsel %vm701, 1, 0
        %v734 = vsel %vm702, 1, 0
        %v735 = vsel %vm703, 1, 0
        %v736 = vsel %vm704, 1, 0
        %v737 = vsel %vm705, 1, 0
        %v738 = vsel %vm706, 1, 0
        %v739 = vsel %vm707, 1, 0
        %vm740 = vcmp.eq.s32.totalorder %v708, 1
        %vm741 = vcmp.eq.s32.totalorder %v709, 1
        %vm742 = vcmp.eq.s32.totalorder %v710, 1
        %vm743 = vcmp.eq.s32.totalorder %v711, 1
        %vm744 = vcmp.eq.s32.totalorder %v712, 1
        %vm745 = vcmp.eq.s32.totalorder %v713, 1
        %vm746 = vcmp.eq.s32.totalorder %v714, 1
        %vm747 = vcmp.eq.s32.totalorder %v715, 1
        %vm748 = vcmp.eq.s32.totalorder %v716, 1
        %vm749 = vcmp.eq.s32.totalorder %v717, 1
        %vm750 = vcmp.eq.s32.totalorder %v718, 1
        %vm751 = vcmp.eq.s32.totalorder %v719, 1
        %vm752 = vcmp.eq.s32.totalorder %v720, 1
        %vm753 = vcmp.eq.s32.totalorder %v721, 1
        %vm754 = vcmp.eq.s32.totalorder %v722, 1
        %vm755 = vcmp.eq.s32.totalorder %v723, 1
        %vm756 = vcmp.eq.s32.totalorder %v724, 1
        %vm757 = vcmp.eq.s32.totalorder %v725, 1
        %vm758 = vcmp.eq.s32.totalorder %v726, 1
        %vm759 = vcmp.eq.s32.totalorder %v727, 1
        %vm760 = vcmp.eq.s32.totalorder %v728, 1
        %vm761 = vcmp.eq.s32.totalorder %v729, 1
        %vm762 = vcmp.eq.s32.totalorder %v730, 1
        %vm763 = vcmp.eq.s32.totalorder %v731, 1
        %vm764 = vcmp.eq.s32.totalorder %v732, 1
        %vm765 = vcmp.eq.s32.totalorder %v733, 1
        %vm766 = vcmp.eq.s32.totalorder %v734, 1
        %vm767 = vcmp.eq.s32.totalorder %v735, 1
        %vm768 = vcmp.eq.s32.totalorder %v736, 1
        %vm769 = vcmp.eq.s32.totalorder %v737, 1
        %vm770 = vcmp.eq.s32.totalorder %v738, 1
        %vm771 = vcmp.eq.s32.totalorder %v739, 1
        %v772 = vsel %vm740, %v577, 0.0
        %v773 = vsel %vm741, %v578, 0.0
        %v774 = vsel %vm742, %v579, 0.0
        %v775 = vsel %vm743, %v580, 0.0
        %v776 = vsel %vm744, %v581, 0.0
        %v777 = vsel %vm745, %v582, 0.0
        %v778 = vsel %vm746, %v583, 0.0
        %v779 = vsel %vm747, %v584, 0.0
        %v780 = vsel %vm748, %v585, 0.0
        %v781 = vsel %vm749, %v586, 0.0
        %v782 = vsel %vm750, %v587, 0.0
        %v783 = vsel %vm751, %v588, 0.0
        %v784 = vsel %vm752, %v589, 0.0
        %v785 = vsel %vm753, %v590, 0.0
        %v786 = vsel %vm754, %v591, 0.0
        %v787 = vsel %vm755, %v592, 0.0
        %v788 = vsel %vm756, %v593, 0.0
        %v789 = vsel %vm757, %v594, 0.0
        %v790 = vsel %vm758, %v595, 0.0
        %v791 = vsel %vm759, %v596, 0.0
        %v792 = vsel %vm760, %v597, 0.0
        %v793 = vsel %vm761, %v598, 0.0
        %v794 = vsel %vm762, %v599, 0.0
        %v795 = vsel %vm763, %v600, 0.0
        %v796 = vsel %vm764, %v601, 0.0
        %v797 = vsel %vm765, %v602, 0.0
        %v798 = vsel %vm766, %v603, 0.0
        %v799 = vsel %vm767, %v604, 0.0
        %v800 = vsel %vm768, %v605, 0.0
        %v801 = vsel %vm769, %v606, 0.0
        %v802 = vsel %vm770, %v607, 0.0
        %v803 = vsel %vm771, %v608, 0.0
        %v804 = vadd.f32 %v772, %v773
        %v805 = vadd.f32 %v804, %v774
        %v806 = vadd.f32 %v805, %v775
        %v807 = vadd.f32 %v806, %v776
        %v808 = vadd.f32 %v807, %v777
        %v809 = vadd.f32 %v808, %v778
        %v810 = vadd.f32 %v809, %v779
        %v811 = vadd.f32 %v810, %v780
        %v812 = vadd.f32 %v811, %v781
        %v813 = vadd.f32 %v812, %v782
        %v814 = vadd.f32 %v813, %v783
        %v815 = vadd.f32 %v814, %v784
        %v816 = vadd.f32 %v815, %v785
        %v817 = vadd.f32 %v816, %v786
        %v818 = vadd.f32 %v817, %v787
        %v819 = vadd.f32 %v818, %v788
        %v820 = vadd.f32 %v819, %v789
        %v821 = vadd.f32 %v820, %v790
        %v822 = vadd.f32 %v821, %v791
        %v823 = vadd.f32 %v822, %v792
        %v824 = vadd.f32 %v823, %v793
        %v825 = vadd.f32 %v824, %v794
        %v826 = vadd.f32 %v825, %v795
        %v827 = vadd.f32 %v826, %v796
        %v828 = vadd.f32 %v827, %v797
        %v829 = vadd.f32 %v828, %v798
        %v830 = vadd.f32 %v829, %v799
        %v831 = vadd.f32 %v830, %v800
        %v832 = vadd.f32 %v831, %v801
        %v833 = vadd.f32 %v832, %v802
        %v834 = vadd.f32 %v833, %v803
        %v835 = vrot.slane %v834, 4
        %v836 = vadd.f32 %v834, %v835
        %v837 = vrot.slane %v836, 2
        %v838 = vadd.f32 %v836, %v837
        %v839 = vrot.slane %v838, 1
        %v840 = vadd.f32 %v838, %v839
        %v841 = vmul.f32 %v840, 0.00390625
        %v842 = vstv %s23
        %vm843 = vcmp.eq.s32.totalorder %v611, %v842
        %v844 = vld [vmem:[#allocation7] sm:$0xff]
        %v845 = vsel %vm843, 1, 0
        %vm846 = vcmp.eq.s32.totalorder %v845, 1
        %v847 = vsel %vm846, %v841, 0.0
        %v848 = vadd.f32 %v844, %v847
        %849 = vst [vmem:[#allocation7] sm:$0xff] %v848
        // Predicated region
        $region45: #{tpu_custom_call.1} parent=31 // pred_check
          %p850 = pneg %p114
        $region46: #{tpu_custom_call.1} parent=31 // pred_check_branch
          %852 = sbr.rel (%p850) target = $region48
        $region47: #{tpu_custom_call.1} parent=31 // pred_region
          %s854 = ssub.s32 128, 128
          %855 = vsyncadd [#allocation4], %s854
          %s857 = sshll.u32 [#allocation7], 4
          %s858 = int_to_ptr.vmem [resolvable:$true] %s857
          %860 = dma.vmem_to_hbm [thread:$0]  %s858, 128, %s3, [#allocation4]
        $region48: #{tpu_custom_call.1} parent=31 // pred_fallthru
          _
        // Predicated region
        $region49: #{tpu_custom_call.1} parent=31 // pred_check
          %p861 = pneg %p114
        $region50: #{tpu_custom_call.1} parent=31 // pred_check_branch
          %863 = sbr.rel (%p861) target = $region52
        $region51: #{tpu_custom_call.1} parent=31 // pred_region
          %864 = dma.done [#allocation4], 128
        $region52: #{tpu_custom_call.1} parent=31 // pred_fallthru
          _
      $region32: #{tpu_custom_call.1} parent=5 // pred_fallthru
        _
      %p865 = scmp.le.s32.totalorder 2, %s14
      // Predicated region
      $region53: #{tpu_custom_call.1} parent=5 // pred_check
        %p866 = pneg %p865
      $region54: #{tpu_custom_call.1} parent=5 // pred_check_branch
        %868 = sbr.rel (%p866) target = $region56
      $region55: #{tpu_custom_call.1} parent=5 // pred_region
        %s869 = ssub.s32 %s14, 2
      $region56: #{tpu_custom_call.1} parent=5 // pred_fallthru
        _
    $region6: #{tpu_custom_call.1} parent=1 // loop_footer
      %s18 = sadd.s32 1, %s14
    $region7: #{tpu_custom_call.1} parent=1 // loop_footer_branch
      %13 = sbr.rel target = $region3
    $region8: #{tpu_custom_call.1} parent=1 // loop_exit
      _
    %870 = vsyncpa [#allocation3], 1
    %s871 = scalar_lea.sflag [#allocation3], 1
    %872 = vsyncpa %s871, 1
    %873 = vsyncpa [#allocation6], 1
    %874 = vsyncpa [#allocation4], 1
    %s875 = scalar_lea.sflag [#allocation4], 1
    %876 = vsyncpa %s875, 1

</llo_original>
